<compile_context>
chip_gen: v7x
topology: tpu7x:2x2x1
jax: 0.10.0
libtpu: 0.0.40
codegen_flags: <defaults>
</compile_context>

<pallas_src>
import functools
import itertools
import numpy as np
import jax
import jax.numpy as jnp
from jax.experimental import pallas as pl
from jax.experimental.pallas import tpu as pltpu

K_PAD = 128  # lane width of every packed row / of the selection matrices

# TODO(synk): xrmocap's search_limbs(convention) table is unavailable here;
# use the standard COCO-17 body skeleton as a deterministic stand-in.
_COCO_BODY_LIMBS = [
    (0, 1), (0, 2), (1, 3), (2, 4),
    (5, 6), (5, 7), (5, 11), (6, 8), (6, 12),
    (7, 9), (8, 10), (11, 12), (11, 13), (12, 14),
    (13, 15), (14, 16),
]


def _search_limbs_synthetic(convention: str) -> np.ndarray:
    # mimics: sorted + itertools.groupby dedupe from the torch module
    limb_idxs = sorted(_COCO_BODY_LIMBS)
    limb_idxs = np.array([x for x, _ in itertools.groupby(limb_idxs)],
                         dtype=np.int32)
    return limb_idxs


def _limb_length_loss_kernel(lhs_ref, const_ref, o_ref, *, n_pad):
    """sum_{n,l} (||t_dst - t_src|| - ||p_dst - p_src||)^2 * limb_conf.

    lhs_ref:   (4*n_pad, 128) f32. Row blocks (each n_pad rows):
               [pred coords | target coords | pred conf | target conf].
               Coord rows: lane 3k+c = keypoints[n, k, c].
               Conf rows:  lane 3k   = conf[n, k], lanes 3k+1/2 = 0.
    const_ref: (128, 384) bf16 (exact 0/1).
               cols [0:128)   src selection: col 3l+c <- lane 3*src[l]+c
               cols [128:256) dst selection: col 3l+c <- lane 3*dst[l]+c
               cols [256:384) xyz reduction: col 256+3l <- lanes 3l+{0,1,2}
    o_ref:     (1, 1) f32.
    """
    sel = const_ref[:, 0:2 * K_PAD].astype(jnp.float32)            # (128, 256)
    red = const_ref[:, 2 * K_PAD:3 * K_PAD].astype(jnp.float32)    # (128, 128)
    lhs = lhs_ref[...]                                             # (4n, 128)

    # Single fused gather: every row block picks up its src/dst values.
    gath = jnp.dot(lhs, sel, preferred_element_type=jnp.float32)   # (4n, 256)
    src = gath[:, 0:K_PAD]
    dst = gath[:, K_PAD:2 * K_PAD]

    # Limb vectors for pred (rows 0..n_pad) and target (rows n_pad..2n_pad).
    d = dst[0:2 * n_pad, :] - src[0:2 * n_pad, :]                  # (2n, 128)
    # Reduce xyz triples with a constant matmul -> |limb_vec|^2 at lane 3l.
    len2 = jnp.dot(d * d, red, preferred_element_type=jnp.float32)  # (2n, 128)
    len_p = jnp.sqrt(len2[0:n_pad, :])                             # (n, 128)
    len_t = jnp.sqrt(len2[n_pad:2 * n_pad, :])                     # (n, 128)

    # Limb confidences (already gathered, lane 3l; other lanes exactly 0).
    conf_p = jnp.minimum(src[2 * n_pad:3 * n_pad, :], dst[2 * n_pad:3 * n_pad, :])
    conf_t = jnp.minimum(src[3 * n_pad:4 * n_pad, :], dst[3 * n_pad:4 * n_pad, :])

    diff = len_t - len_p
    loss = diff * diff * (conf_p * conf_t)                         # (n, 128)
    # Padded rows/lanes contribute exactly 0 (zero activations / zero conf).
    per_row = jnp.sum(loss, axis=1, keepdims=True)                 # (n, 1)
    o_ref[...] = jnp.sum(per_row, axis=0, keepdims=True)           # (1, 1)


class LimbLengthLossPallas:
    """JAX/Pallas re-implementation of xrmocap LimbLengthLoss.forward."""

    def __init__(self, convention: str = 'coco', reduction: str = 'mean',
                 loss_weight: float = 1.0, eps: float = 1e-4):
        assert reduction in ('none', 'mean', 'sum')
        self.reduction = reduction
        self.loss_weight = loss_weight
        self.eps = eps  # not used in forward (matches the torch module)
        self.convention = convention
        self.limb_idxs = _search_limbs_synthetic(convention)  # (L, 2)

        L = self.limb_idxs.shape[0]
        assert 3 * L <= K_PAD, "too many limbs for the 128-lane layout"
        assert 3 * (int(self.limb_idxs.max()) + 1) <= K_PAD, \
            "keypoint index too large for the 128-lane layout"

        # One fused constant: [src sel | dst sel | xyz reduction], bf16 (0/1).
        const = np.zeros((K_PAD, 3 * K_PAD), np.float32)
        for l, (s, d) in enumerate(self.limb_idxs):
            for c in range(3):
                const[3 * s + c, 3 * l + c] = 1.0                   # src gather
                const[3 * d + c, K_PAD + 3 * l + c] = 1.0           # dst gather
                const[3 * l + c, 2 * K_PAD + 3 * l] = 1.0           # xyz reduce
        self._const = jnp.asarray(const, dtype=jnp.bfloat16)

    def __call__(self, pred, target, pred_conf=None, target_conf=None,
                 loss_weight_override=None, reduction_override=None):
        assert pred.ndim == 3 and pred.shape[-1] == 3
        assert pred.shape == target.shape
        N, K, _ = pred.shape
        assert 3 * K <= K_PAD, "too many keypoints for the 128-lane layout"
        if pred_conf is None:
            pred_conf = jnp.ones((N, K), jnp.float32)
        if target_conf is None:
            target_conf = jnp.ones((N, K), jnp.float32)
        assert pred_conf.shape == (N, K) and target_conf.shape == (N, K)
        assert reduction_override in (None, 'none', 'mean', 'sum')
        reduction = (reduction_override if reduction_override is not None
                     else self.reduction)
        loss_weight = (loss_weight_override if loss_weight_override is not None
                       else self.loss_weight)
        if reduction == 'none':
            # TODO(synk): per-limb (N, L) output path not wired into the kernel.
            raise NotImplementedError("reduction='none' not implemented")

        n_pad = ((N + 7) // 8) * 8
        C = 3 * K
        # Native-order flatten (NO transpose): row n, lane 3k+c = pred[n,k,c].
        kp_p = pred.reshape(N, C).astype(jnp.float32)
        kp_t = target.reshape(N, C).astype(jnp.float32)
        # Confidences on the same lane grid: conf[n,k] at lane 3k, zeros at 3k+1/2.
        cf_p = jnp.pad(pred_conf.astype(jnp.float32)[:, :, None],
                       ((0, 0), (0, 0), (0, 2))).reshape(N, C)
        cf_t = jnp.pad(target_conf.astype(jnp.float32)[:, :, None],
                       ((0, 0), (0, 0), (0, 2))).reshape(N, C)

        # Single packed activation slab: (4, N, 3K) -> (4*n_pad, 128).
        lhs = jnp.stack([kp_p, kp_t, cf_p, cf_t], axis=0)
        lhs = jnp.pad(lhs, ((0, 0), (0, n_pad - N), (0, K_PAD - C)))
        lhs = lhs.reshape(4 * n_pad, K_PAD)

        vmem = pltpu.MemorySpace.VMEM
        loss_sum = pl.pallas_call(
            functools.partial(_limb_length_loss_kernel, n_pad=n_pad),
            out_shape=jax.ShapeDtypeStruct((1, 1), jnp.float32),
            in_specs=[pl.BlockSpec(memory_space=vmem)] * 2,
            out_specs=pl.BlockSpec(memory_space=vmem),
        )(lhs, self._const)[0, 0]

        L = self.limb_idxs.shape[0]
        if reduction == 'mean':
            loss = loss_sum / float(N * L)
        else:  # 'sum'
            loss = loss_sum
        return loss * loss_weight


def _reference_loss(pred, target, pred_conf, target_conf, limb_idxs,
                    reduction='mean', loss_weight=1.0):
    """Pure-JAX reimplementation of the torch semantics (for verification)."""
    def limb_len(kp):
        src = kp[:, limb_idxs[:, 0], :3]
        dst = kp[:, limb_idxs[:, 1], :3]
        return jnp.linalg.norm(dst - src, axis=2)

    def limb_conf(conf):
        return jnp.minimum(conf[:, limb_idxs[:, 1]], conf[:, limb_idxs[:, 0]])

    lt = limb_len(target)
    lp = limb_len(pred)
    lc = limb_conf(target_conf) * limb_conf(pred_conf)
    loss = (lt - lp) ** 2 * lc
    if reduction == 'mean':
        loss = loss.mean()
    elif reduction == 'sum':
        loss = loss.sum()
    return loss * loss_weight


if __name__ == "__main__":
    key = jax.random.PRNGKey(0)
    k1, k2, k3, k4 = jax.random.split(key, 4)
    N, K = 2, 17
    pred = jax.random.normal(k1, (N, K, 3), jnp.float32)
    target = jax.random.normal(k2, (N, K, 3), jnp.float32)
    pred_conf = jax.random.uniform(k3, (N, K), jnp.float32)
    target_conf = jax.random.uniform(k4, (N, K), jnp.float32)

    loss_mod = LimbLengthLossPallas(convention='coco', reduction='mean',
                                    loss_weight=1.0)
    out = loss_mod(pred, target, pred_conf, target_conf)
    out = jax.block_until_ready(out)

    ref = _reference_loss(pred, target, pred_conf, target_conf,
                          loss_mod.limb_idxs, reduction='mean',
                          loss_weight=1.0)
    ref = jax.block_until_ready(ref)

    assert np.allclose(np.asarray(out), np.asarray(ref), rtol=1e-5, atol=1e-5), \
        (float(out), float(ref))
    print("KERNEL_OK")
</pallas_src>

<mosaic_0001>
module attributes {stable_mosaic.version = 11 : i64} {
  func.func @_limb_length_loss_kernel(%arg0: memref<32x128xf32, #tpu.memory_space<vmem>>, %arg1: memref<128x384xbf16, #tpu.memory_space<vmem>>, %arg2: memref<1x1xf32, #tpu.memory_space<vmem>>) attributes {dimension_semantics = [], scalar_prefetch = 0 : i64, scratch_operands = 0 : i64, tpu.core_type = #tpu.core_type<tc>} {
    %c0 = arith.constant 0 : index
    %c0_0 = arith.constant 0 : index
    %0 = vector.load %arg1[%c0, %c0_0] : memref<128x384xbf16, #tpu.memory_space<vmem>>, vector<128x256xbf16>
    %1 = arith.extf %0 : vector<128x256xbf16> to vector<128x256xf32>
    %c0_1 = arith.constant 0 : index
    %c256 = arith.constant 256 : index
    %2 = vector.load %arg1[%c0_1, %c256] : memref<128x384xbf16, #tpu.memory_space<vmem>>, vector<128x128xbf16>
    %3 = arith.extf %2 : vector<128x128xbf16> to vector<128x128xf32>
    %c0_2 = arith.constant 0 : index
    %c0_3 = arith.constant 0 : index
    %4 = vector.load %arg0[%c0_2, %c0_3] : memref<32x128xf32, #tpu.memory_space<vmem>>, vector<32x128xf32>
    %cst = arith.constant dense<0.000000e+00> : vector<32x256xf32>
    %5 = tpu.matmul %4, %1, %cst {dimension_numbers = #tpu.dot_dimension_numbers<[1], [0], [0], [1], [0, 0, 1, 1], [], []>} : vector<32x128xf32>, vector<128x256xf32>, vector<32x256xf32> -> vector<32x256xf32>
    %6 = vector.extract_strided_slice %5 {offsets = [0, 0], sizes = [32, 128], strides = [1, 1]} : vector<32x256xf32> to vector<32x128xf32>
    %7 = vector.extract_strided_slice %5 {offsets = [0, 128], sizes = [32, 128], strides = [1, 1]} : vector<32x256xf32> to vector<32x128xf32>
    %8 = vector.extract_strided_slice %7 {offsets = [0, 0], sizes = [16, 128], strides = [1, 1]} : vector<32x128xf32> to vector<16x128xf32>
    %9 = vector.extract_strided_slice %6 {offsets = [0, 0], sizes = [16, 128], strides = [1, 1]} : vector<32x128xf32> to vector<16x128xf32>
    %10 = arith.subf %8, %9 : vector<16x128xf32>
    %11 = arith.mulf %10, %10 : vector<16x128xf32>
    %cst_4 = arith.constant dense<0.000000e+00> : vector<16x128xf32>
    %12 = tpu.matmul %11, %3, %cst_4 {dimension_numbers = #tpu.dot_dimension_numbers<[1], [0], [0], [1], [0, 0, 1, 1], [], []>} : vector<16x128xf32>, vector<128x128xf32>, vector<16x128xf32> -> vector<16x128xf32>
    %13 = vector.extract_strided_slice %12 {offsets = [0, 0], sizes = [8, 128], strides = [1, 1]} : vector<16x128xf32> to vector<8x128xf32>
    %14 = math.sqrt %13 : vector<8x128xf32>
    %15 = vector.extract_strided_slice %12 {offsets = [8, 0], sizes = [8, 128], strides = [1, 1]} : vector<16x128xf32> to vector<8x128xf32>
    %16 = math.sqrt %15 : vector<8x128xf32>
    %17 = vector.extract_strided_slice %6 {offsets = [16, 0], sizes = [8, 128], strides = [1, 1]} : vector<32x128xf32> to vector<8x128xf32>
    %18 = vector.extract_strided_slice %7 {offsets = [16, 0], sizes = [8, 128], strides = [1, 1]} : vector<32x128xf32> to vector<8x128xf32>
    %19 = arith.minimumf %17, %18 : vector<8x128xf32>
    %20 = vector.extract_strided_slice %6 {offsets = [24, 0], sizes = [8, 128], strides = [1, 1]} : vector<32x128xf32> to vector<8x128xf32>
    %21 = vector.extract_strided_slice %7 {offsets = [24, 0], sizes = [8, 128], strides = [1, 1]} : vector<32x128xf32> to vector<8x128xf32>
    %22 = arith.minimumf %20, %21 : vector<8x128xf32>
    %23 = arith.subf %16, %14 : vector<8x128xf32>
    %24 = arith.mulf %23, %23 : vector<8x128xf32>
    %25 = arith.mulf %19, %22 : vector<8x128xf32>
    %26 = arith.mulf %24, %25 : vector<8x128xf32>
    %cst_5 = arith.constant dense<0.000000e+00> : vector<8xf32>
    %27 = vector.multi_reduction <add>, %26, %cst_5 [1] : vector<8x128xf32> to vector<8xf32>
    %28 = vector.shape_cast %27 : vector<8xf32> to vector<8x1xf32>
    %cst_6 = arith.constant dense<0.000000e+00> : vector<1xf32>
    %29 = vector.multi_reduction <add>, %28, %cst_6 [0] : vector<8x1xf32> to vector<1xf32>
    %30 = vector.shape_cast %29 : vector<1xf32> to vector<1x1xf32>
    %c0_7 = arith.constant 0 : index
    %c0_8 = arith.constant 0 : index
    %31 = vector.load %arg2[%c0_7, %c0_8] : memref<1x1xf32, #tpu.memory_space<vmem>>, vector<1x1xf32>
    tpu.vector_store %arg2[%c0_7, %c0_8], %30 {strides = array<i32>} : memref<1x1xf32, #tpu.memory_space<vmem>>, vector<1x1xf32>,
    return
  }
}

</mosaic_0001>

<llo_original>
// kernel: tpu_custom_call.1
$region0: #{tpu_custom_call.1}
  #allocation0 [shape = 'u32[]', space=smem, size = 0x4, offset = 0x4, fixed_abs, tag = 'smem constant byte address 0x4 - core index']
  #allocation1 [shape = 'u32[144,128]{1,0:T(1,128)}', space=vmem, size = 0x12000, scoped, tag = 'internal scratch']
  %s0 = inlined_call_operand.hbm [shape: f32[32,128], index: 0, kind: input, shape index: {}]
  %s1 = inlined_call_operand.hbm [shape: bf16[128,384], index: 1, kind: input, shape index: {}]
  %s2 = inlined_call_operand.hbm [shape: f32[1,1], index: 2, kind: output, shape index: {}]
  %s3 = sld [smem:[#allocation0]]
  $region26: #{tpu_custom_call.1} parent=0
    _
  %s5 = ssub.s32 1, %s3
  %s6 = scalar_select 0, %s5, %s3
  $region1: #{tpu_custom_call.1} parent=0
    #allocation2 [shape = 'u8[16384]{0}', space=vmem, size = 0x4000, scoped, tag = 'input window, operand 0, single buffered']
    #allocation3 [shape = 's32[1]{0}', space=sflag, size = 0x4, scoped, tag = 'scoped memory for tpu_custom_call.1']
    #allocation4 [shape = 's32[1]{0}', space=sflag, size = 0x4, scoped, tag = 'scoped memory for tpu_custom_call.1']
    #allocation5 [shape = 'u8[98304]{0}', space=vmem, size = 0x18000, scoped, tag = 'input window, operand 1, single buffered']
    #allocation6 [shape = 's32[1]{0}', space=sflag, size = 0x4, scoped, tag = 'scoped memory for tpu_custom_call.1']
    #allocation7 [shape = 'u8[512]{0}', space=vmem, size = 0x400, scoped, tag = 'output window, operand 0, single buffered']
    %7 = vsyncpa [#allocation3], 0
    %8 = vsyncpa [#allocation6], 0
    %9 = vsyncpa [#allocation4], 0
    // Predicated region
    $region2: #{tpu_custom_call.1} parent=1 // pred_check
      _
    $region3: #{tpu_custom_call.1} parent=1 // pred_check_branch
      %11 = sbr.rel (0) target = $region5
    $region4: #{tpu_custom_call.1} parent=1 // pred_region
      %s13 = ssub.s32 512, 512
      %14 = vsyncadd [#allocation3], %s13
      %s15 = sshll.u32 [#allocation2], 4
      %s16 = int_to_ptr.vmem [resolvable:$true] %s15
      %21 = dma.hbm_to_vmem [thread:$0]  %s0, 512, %s16, [#allocation3], 128, 128, 8
    $region5: #{tpu_custom_call.1} parent=1 // pred_fallthru
      _
    // Predicated region
    $region6: #{tpu_custom_call.1} parent=1 // pred_check
      _
    $region7: #{tpu_custom_call.1} parent=1 // pred_check_branch
      %23 = sbr.rel (0) target = $region9
    $region8: #{tpu_custom_call.1} parent=1 // pred_region
      %s25 = ssub.s32 3072, 3072
      %26 = vsyncadd [#allocation6], %s25
      %s27 = sshll.u32 [#allocation5], 4
      %s28 = int_to_ptr.vmem [resolvable:$true] %s27
      %33 = dma.hbm_to_vmem [thread:$0]  %s1, 3072, %s28, [#allocation6], 192, 192, 12
    $region9: #{tpu_custom_call.1} parent=1 // pred_fallthru
      _
    // Predicated region
    $region10: #{tpu_custom_call.1} parent=1 // pred_check
      _
    $region11: #{tpu_custom_call.1} parent=1 // pred_check_branch
      %35 = sbr.rel (0) target = $region13
    $region12: #{tpu_custom_call.1} parent=1 // pred_region
      %36 = dma.done [#allocation3], 512
    $region13: #{tpu_custom_call.1} parent=1 // pred_fallthru
      _
    // Predicated region
    $region14: #{tpu_custom_call.1} parent=1 // pred_check
      _
    $region15: #{tpu_custom_call.1} parent=1 // pred_check_branch
      %38 = sbr.rel (0) target = $region17
    $region16: #{tpu_custom_call.1} parent=1 // pred_region
      %39 = dma.done [#allocation6], 3072
    $region17: #{tpu_custom_call.1} parent=1 // pred_fallthru
      _
    %v40 = vld [vmem:[#allocation5] sm:$0xff]
    %v41 = vld [vmem:[#allocation5 + $0xc] sm:$0xff]
    %v42 = vld [vmem:[#allocation5 + $0x18] sm:$0xff]
    %v43 = vld [vmem:[#allocation5 + $0x24] sm:$0xff]
    %v44 = vld [vmem:[#allocation5 + $0x30] sm:$0xff]
    %v45 = vld [vmem:[#allocation5 + $0x3c] sm:$0xff]
    %v46 = vld [vmem:[#allocation5 + $0x48] sm:$0xff]
    %v47 = vld [vmem:[#allocation5 + $0x54] sm:$0xff]
    %v48 = vld [vmem:[#allocation5 + $0x60] sm:$0xff]
    %v49 = vld [vmem:[#allocation5 + $0x6c] sm:$0xff]
    %v50 = vld [vmem:[#allocation5 + $0x78] sm:$0xff]
    %v51 = vld [vmem:[#allocation5 + $0x84] sm:$0xff]
    %v52 = vld [vmem:[#allocation5 + $0x90] sm:$0xff]
    %v53 = vld [vmem:[#allocation5 + $0x9c] sm:$0xff]
    %v54 = vld [vmem:[#allocation5 + $0xa8] sm:$0xff]
    %v55 = vld [vmem:[#allocation5 + $0xb4] sm:$0xff]
    %v56 = vunpack.c.l.bf16 %v40
    %v57 = vunpack.c.h.bf16 %v40
    %v58 = vunpack.c.l.bf16 %v41
    %v59 = vunpack.c.h.bf16 %v41
    %v60 = vunpack.c.l.bf16 %v42
    %v61 = vunpack.c.h.bf16 %v42
    %v62 = vunpack.c.l.bf16 %v43
    %v63 = vunpack.c.h.bf16 %v43
    %v64 = vunpack.c.l.bf16 %v44
    %v65 = vunpack.c.h.bf16 %v44
    %v66 = vunpack.c.l.bf16 %v45
    %v67 = vunpack.c.h.bf16 %v45
    %v68 = vunpack.c.l.bf16 %v46
    %v69 = vunpack.c.h.bf16 %v46
    %v70 = vunpack.c.l.bf16 %v47
    %v71 = vunpack.c.h.bf16 %v47
    %v72 = vunpack.c.l.bf16 %v48
    %v73 = vunpack.c.h.bf16 %v48
    %v74 = vunpack.c.l.bf16 %v49
    %v75 = vunpack.c.h.bf16 %v49
    %v76 = vunpack.c.l.bf16 %v50
    %v77 = vunpack.c.h.bf16 %v50
    %v78 = vunpack.c.l.bf16 %v51
    %v79 = vunpack.c.h.bf16 %v51
    %v80 = vunpack.c.l.bf16 %v52
    %v81 = vunpack.c.h.bf16 %v52
    %v82 = vunpack.c.l.bf16 %v53
    %v83 = vunpack.c.h.bf16 %v53
    %v84 = vunpack.c.l.bf16 %v54
    %v85 = vunpack.c.h.bf16 %v54
    %v86 = vunpack.c.l.bf16 %v55
    %v87 = vunpack.c.h.bf16 %v55
    %v88 = vld [vmem:[#allocation5 + $0x8] sm:$0xf]
    %v89 = vld [vmem:[#allocation5 + $0x14] sm:$0xf]
    %v90 = vld [vmem:[#allocation5 + $0x20] sm:$0xf]
    %v91 = vld [vmem:[#allocation5 + $0x2c] sm:$0xf]
    %v92 = vld [vmem:[#allocation5 + $0x38] sm:$0xf]
    %v93 = vld [vmem:[#allocation5 + $0x44] sm:$0xf]
    %v94 = vld [vmem:[#allocation5 + $0x50] sm:$0xf]
    %v95 = vld [vmem:[#allocation5 + $0x5c] sm:$0xf]
    %v96 = vld [vmem:[#allocation5 + $0x68] sm:$0xf]
    %v97 = vld [vmem:[#allocation5 + $0x74] sm:$0xf]
    %v98 = vld [vmem:[#allocation5 + $0x80] sm:$0xf]
    %v99 = vld [vmem:[#allocation5 + $0x8c] sm:$0xf]
    %v100 = vld [vmem:[#allocation5 + $0x98] sm:$0xf]
    %v101 = vld [vmem:[#allocation5 + $0xa4] sm:$0xf]
    %v102 = vld [vmem:[#allocation5 + $0xb0] sm:$0xf]
    %v103 = vld [vmem:[#allocation5 + $0xbc] sm:$0xf]
    %v104 = vunpack.c.l.bf16 %v88
    %v105 = vunpack.c.l.bf16 %v89
    %v106 = vunpack.c.l.bf16 %v90
    %v107 = vunpack.c.l.bf16 %v91
    %v108 = vunpack.c.l.bf16 %v92
    %v109 = vunpack.c.l.bf16 %v93
    %v110 = vunpack.c.l.bf16 %v94
    %v111 = vunpack.c.l.bf16 %v95
    %v112 = vunpack.c.l.bf16 %v96
    %v113 = vunpack.c.l.bf16 %v97
    %v114 = vunpack.c.l.bf16 %v98
    %v115 = vunpack.c.l.bf16 %v99
    %v116 = vunpack.c.l.bf16 %v100
    %v117 = vunpack.c.l.bf16 %v101
    %v118 = vunpack.c.l.bf16 %v102
    %v119 = vunpack.c.l.bf16 %v103
    %v120 = vld [vmem:[#allocation2] sm:$0xff]
    %v121 = vld [vmem:[#allocation2 + $0x8] sm:$0xff]
    %v122 = vld [vmem:[#allocation2 + $0x10] sm:$0xff]
    %v123 = vld [vmem:[#allocation2 + $0x18] sm:$0xff]
    %124 = vmatprep.subr.mxu0 %v57
    %125 = vmatpush1.msra.mxu0 %v56
    %126 = vmatprep.subr.mxu0 %v59
    %127 = vmatpush1.msra.mxu0 %v58
    %128 = vmatprep.subr.mxu0 %v61
    %129 = vmatpush1.msra.mxu0 %v60
    %130 = vmatprep.subr.mxu0 %v63
    %131 = vmatpush1.msra.mxu0 %v62
    %132 = vmatprep.subr.mxu0 %v65
    %133 = vmatpush1.msra.mxu0 %v64
    %134 = vmatprep.subr.mxu0 %v67
    %135 = vmatpush1.msra.mxu0 %v66
    %136 = vmatprep.subr.mxu0 %v69
    %137 = vmatpush1.msra.mxu0 %v68
    %138 = vmatprep.subr.mxu0 %v71
    %139 = vmatpush1.msra.mxu0 %v70
    %140 = vmatprep.subr.mxu0 %v73
    %141 = vmatpush1.msra.mxu0 %v72
    %142 = vmatprep.subr.mxu0 %v75
    %143 = vmatpush1.msra.mxu0 %v74
    %144 = vmatprep.subr.mxu0 %v77
    %145 = vmatpush1.msra.mxu0 %v76
    %146 = vmatprep.subr.mxu0 %v79
    %147 = vmatpush1.msra.mxu0 %v78
    %148 = vmatprep.subr.mxu0 %v81
    %149 = vmatpush1.msra.mxu0 %v80
    %150 = vmatprep.subr.mxu0 %v83
    %151 = vmatpush1.msra.mxu0 %v82
    %152 = vmatprep.subr.mxu0 %v85
    %153 = vmatpush1.msra.mxu0 %v84
    %154 = vmatprep.subr.mxu0 %v87
    %155 = vmatpush1.msra.mxu0 %v86
    %156 = vmatprep.subr.mxu0 0.0
    %157 = vmatpush1.msra.mxu0 0.0
    %158 = vmatprep.subr.mxu0 0.0
    %159 = vmatpush1.msra.mxu0 0.0
    %160 = vmatprep.subr.mxu0 0.0
    %161 = vmatpush1.msra.mxu0 0.0
    %162 = vmatprep.subr.mxu0 0.0
    %163 = vmatpush1.msra.mxu0 0.0
    %164 = vmatprep.subr.mxu0 0.0
    %165 = vmatpush1.msra.mxu0 0.0
    %166 = vmatprep.subr.mxu0 0.0
    %167 = vmatpush1.msra.mxu0 0.0
    %168 = vmatprep.subr.mxu0 0.0
    %169 = vmatpush1.msra.mxu0 0.0
    %170 = vmatprep.subr.mxu0 0.0
    %171 = vmatpush1.msra.mxu0 0.0
    %172 = vmatprep.subr.mxu0 0.0
    %173 = vmatpush1.msra.mxu0 0.0
    %174 = vmatprep.subr.mxu0 0.0
    %175 = vmatpush1.msra.mxu0 0.0
    %176 = vmatprep.subr.mxu0 0.0
    %177 = vmatpush1.msra.mxu0 0.0
    %178 = vmatprep.subr.mxu0 0.0
    %179 = vmatpush1.msra.mxu0 0.0
    %180 = vmatprep.subr.mxu0 0.0
    %181 = vmatpush1.msra.mxu0 0.0
    %182 = vmatprep.subr.mxu0 0.0
    %183 = vmatpush1.msra.mxu0 0.0
    %184 = vmatprep.subr.mxu0 0.0
    %185 = vmatpush1.msra.mxu0 0.0
    %186 = vmatprep.subr.mxu0 0.0
    %187 = vmatpush1.msra.mxu0 0.0
    %188 = vmatprep.mubr.f32.mxu0 0.0
    %189 = vmatmul.mubr.f32.gmra.mrb[0].mxu0 %v120
    %v190 = vpop.f32.mrb[0].mxu0
    %v191 = vadd.f32 0.0, %v190
    %v192 = vpop.f32.mrb[0].mxu0
    %v193 = vadd.f32 0.0, %v192
    %194 = vmatprep.mubr.f32.mxu0 0.0
    %195 = vmatmul.mubr.f32.gmra.mrb[0].mxu0 %v121
    %v196 = vpop.f32.mrb[0].mxu0
    %v197 = vadd.f32 0.0, %v196
    %v198 = vpop.f32.mrb[0].mxu0
    %v199 = vadd.f32 0.0, %v198
    %200 = vmatprep.mubr.f32.mxu0 0.0
    %201 = vmatmul.mubr.f32.gmra.mrb[0].mxu0 %v122
    %v202 = vpop.f32.mrb[0].mxu0
    %v203 = vadd.f32 0.0, %v202
    %v204 = vpop.f32.mrb[0].mxu0
    %v205 = vadd.f32 0.0, %v204
    %206 = vmatprep.mubr.f32.mxu0 0.0
    %207 = vmatmul.mubr.f32.gmra.mrb[0].mxu0 %v123
    %v208 = vpop.f32.mrb[0].mxu0
    %v209 = vadd.f32 0.0, %v208
    %v210 = vpop.f32.mrb[0].mxu0
    %v211 = vadd.f32 0.0, %v210
    %212 = vdwg.mxu0
    %v213 = vsub.f32 %v193, %v191
    %v214 = vsub.f32 %v199, %v197
    %v215 = vmul.f32 %v213, %v213
    %v216 = vmul.f32 %v214, %v214
    %217 = vmatprep.subr.mxu0 0.0
    %218 = vmatpush1.msra.mxu0 %v104
    %219 = vmatprep.subr.mxu0 0.0
    %220 = vmatpush1.msra.mxu0 %v105
    %221 = vmatprep.subr.mxu0 0.0
    %222 = vmatpush1.msra.mxu0 %v106
    %223 = vmatprep.subr.mxu0 0.0
    %224 = vmatpush1.msra.mxu0 %v107
    %225 = vmatprep.subr.mxu0 0.0
    %226 = vmatpush1.msra.mxu0 %v108
    %227 = vmatprep.subr.mxu0 0.0
    %228 = vmatpush1.msra.mxu0 %v109
    %229 = vmatprep.subr.mxu0 0.0
    %230 = vmatpush1.msra.mxu0 %v110
    %231 = vmatprep.subr.mxu0 0.0
    %232 = vmatpush1.msra.mxu0 %v111
    %233 = vmatprep.subr.mxu0 0.0
    %234 = vmatpush1.msra.mxu0 %v112
    %235 = vmatprep.subr.mxu0 0.0
    %236 = vmatpush1.msra.mxu0 %v113
    %237 = vmatprep.subr.mxu0 0.0
    %238 = vmatpush1.msra.mxu0 %v114
    %239 = vmatprep.subr.mxu0 0.0
    %240 = vmatpush1.msra.mxu0 %v115
    %241 = vmatprep.subr.mxu0 0.0
    %242 = vmatpush1.msra.mxu0 %v116
    %243 = vmatprep.subr.mxu0 0.0
    %244 = vmatpush1.msra.mxu0 %v117
    %245 = vmatprep.subr.mxu0 0.0
    %246 = vmatpush1.msra.mxu0 %v118
    %247 = vmatprep.subr.mxu0 0.0
    %248 = vmatpush1.msra.mxu0 %v119
    %249 = vmatprep.subr.mxu0 0.0
    %250 = vmatpush1.msra.mxu0 0.0
    %251 = vmatprep.subr.mxu0 0.0
    %252 = vmatpush1.msra.mxu0 0.0
    %253 = vmatprep.subr.mxu0 0.0
    %254 = vmatpush1.msra.mxu0 0.0
    %255 = vmatprep.subr.mxu0 0.0
    %256 = vmatpush1.msra.mxu0 0.0
    %257 = vmatprep.subr.mxu0 0.0
    %258 = vmatpush1.msra.mxu0 0.0
    %259 = vmatprep.subr.mxu0 0.0
    %260 = vmatpush1.msra.mxu0 0.0
    %261 = vmatprep.subr.mxu0 0.0
    %262 = vmatpush1.msra.mxu0 0.0
    %263 = vmatprep.subr.mxu0 0.0
    %264 = vmatpush1.msra.mxu0 0.0
    %265 = vmatprep.subr.mxu0 0.0
    %266 = vmatpush1.msra.mxu0 0.0
    %267 = vmatprep.subr.mxu0 0.0
    %268 = vmatpush1.msra.mxu0 0.0
    %269 = vmatprep.subr.mxu0 0.0
    %270 = vmatpush1.msra.mxu0 0.0
    %271 = vmatprep.subr.mxu0 0.0
    %272 = vmatpush1.msra.mxu0 0.0
    %273 = vmatprep.subr.mxu0 0.0
    %274 = vmatpush1.msra.mxu0 0.0
    %275 = vmatprep.subr.mxu0 0.0
    %276 = vmatpush1.msra.mxu0 0.0
    %277 = vmatprep.subr.mxu0 0.0
    %278 = vmatpush1.msra.mxu0 0.0
    %279 = vmatprep.subr.mxu0 0.0
    %280 = vmatpush1.msra.mxu0 0.0
    %281 = vmatprep.mubr.f32.mxu0 0.0
    %282 = vmatmul.mubr.f32.gmra.mrb[0].mxu0 %v215
    %v283 = vpop.f32.mrb[0].mxu0
    %v284 = vadd.f32 0.0, %v283
    %v285 = vpop.f32.mrb[0].mxu0
    %286 = vmatprep.mubr.f32.mxu0 0.0
    %287 = vmatmul.mubr.f32.gmra.mrb[0].mxu0 %v216
    %v288 = vpop.f32.mrb[0].mxu0
    %v289 = vadd.f32 0.0, %v288
    %v290 = vpop.f32.mrb[0].mxu0
    %291 = vdwg.mxu0
    %v292 = vrsqrt.pop %v284
    %v293 = vmul.f32 %v284, %v292
    %vm294 = vcmp.eq.f32.partialorder %v284, inf
    %v295 = vsel %vm294, %v284, %v293
    %vm296 = vcmp.eq.f32.partialorder %v284, 0.0
    %v297 = vand.u32 %v284, 2147483648
    %v298 = vsel %vm296, %v297, %v295
    %v299 = vrsqrt.pop %v289
    %v300 = vmul.f32 %v289, %v299
    %vm301 = vcmp.eq.f32.partialorder %v289, inf
    %v302 = vsel %vm301, %v289, %v300
    %vm303 = vcmp.eq.f32.partialorder %v289, 0.0
    %v304 = vand.u32 %v289, 2147483648
    %v305 = vsel %vm303, %v304, %v302
    %v306 = vmin.f32 %v203, %v205
    %v307 = vmin.f32 %v209, %v211
    %v308 = vsub.f32 %v305, %v298
    %v309 = vmul.f32 %v308, %v308
    %v310 = vmul.f32 %v306, %v307
    %v311 = vmul.f32 %v309, %v310
    %312 = vadd.xlane.f32.xlu0 %v311
    %v313 = vpop.xlane.xlu0 %312
    %v314 = vrot.slane %v313, 4
    %v315 = vadd.f32 %v313, %v314
    %v316 = vrot.slane %v315, 2
    %v317 = vadd.f32 %v315, %v316
    %v318 = vrot.slane %v317, 1
    %v319 = vadd.f32 %v317, %v318
    %vm320 = vcmask 0
    %321 = vst.msk [vmem:[#allocation7] sm:$0x1] %vm320, %v319
    // Predicated region
    $region18: #{tpu_custom_call.1} parent=1 // pred_check
      _
    $region19: #{tpu_custom_call.1} parent=1 // pred_check_branch
      %323 = sbr.rel (0) target = $region21
    $region20: #{tpu_custom_call.1} parent=1 // pred_region
      %s325 = ssub.s32 16, 16
      %326 = vsyncadd [#allocation4], %s325
      %s328 = sshll.u32 [#allocation7], 4
      %s329 = int_to_ptr.vmem [resolvable:$true] %s328
      %331 = dma.vmem_to_hbm [thread:$0]  %s329, 16, %s2, [#allocation4]
    $region21: #{tpu_custom_call.1} parent=1 // pred_fallthru
      _
    // Predicated region
    $region22: #{tpu_custom_call.1} parent=1 // pred_check
      _
    $region23: #{tpu_custom_call.1} parent=1 // pred_check_branch
      %333 = sbr.rel (0) target = $region25
    $region24: #{tpu_custom_call.1} parent=1 // pred_region
      %334 = dma.done [#allocation4], 16
    $region25: #{tpu_custom_call.1} parent=1 // pred_fallthru
      _
    %335 = vsyncpa [#allocation3], 1
    %336 = vsyncpa [#allocation6], 1
    %337 = vsyncpa [#allocation4], 1

</llo_original>
